<compile_context>
chip_gen: v7x
topology: tpu7x:2x2x1
jax: 0.10.0
libtpu: 0.0.40
codegen_flags: <defaults>
</compile_context>

<pallas_src>
import jax
import jax.numpy as jnp
from jax.experimental import pallas as pl
from jax.experimental.pallas import tpu as pltpu


def _drop_channel_kernel(scale_ref, x_ref, o_ref):
    """out = x * scale, scale is (tile_rows, 1): 0 or 1/keep_prob per channel."""
    o_ref[...] = (x_ref[...] * scale_ref[...]).astype(o_ref.dtype)


def _round_up(a: int, b: int) -> int:
    return ((a + b - 1) // b) * b


def _target_block_bytes() -> int:
    """Per-buffer block-size target, scaled for the HBM bandwidth generation."""
    try:
        kind = jax.devices()[0].device_kind.lower()
    except Exception:
        kind = ""
    if "v7" in kind:
        # ~3.2 TB/s per TC: bigger blocks amortize the ~0.35 us per-step
        # overhead; 4 live buffers x 4 MiB still fits the 32 MiB scoped VMEM.
        return 4 * 1024 * 1024
    # v5e / v6e (and CPU interpret): 2 MiB keeps 4 live buffers well under the
    # 16 MiB (v5e) default scoped-VMEM limit and is already ~roofline on v6e.
    return 2 * 1024 * 1024


def drop_channel(x: jax.Array, p: float = 0.2, *, key=None, seed: int = 0,
                 training: bool = True) -> jax.Array:
    """Pallas implementation of DropChannel.forward (NCHW input)."""
    if (not training) or p <= 0.0:
        return x                      # eval / p == 0: exactly identity

    keep_prob = 1.0 - float(p)
    N, C = x.shape[0], x.shape[1]
    NC = N * C
    x2d = x.reshape(NC, -1)           # channels as rows, spatial as lanes
    HW = x2d.shape[1]
    itemsize = jnp.dtype(x.dtype).itemsize

    # Per-channel keep decision, computed once in plain JAX (NC * 4 bytes of
    # extra HBM traffic -- negligible next to the x read/write stream).
    if key is None:
        key = jax.random.PRNGKey(seed)
    keep = jax.random.bernoulli(key, keep_prob, (NC, 1))
    scale_dtype = x.dtype if jnp.issubdtype(x.dtype, jnp.floating) else jnp.float32
    scale = jnp.where(keep, 1.0 / keep_prob, 0.0).astype(scale_dtype)

    sublane = 8 * max(1, 4 // itemsize)      # 8 f32, 16 bf16/f16, 32 int8/fp8
    target_bytes = _target_block_bytes()

    # Rare path: huge rows whose length is not a 128 multiple cannot be
    # column-tiled; pad the lane axis so they can (slice back afterwards).
    pad_cols = 0
    if HW % 128 != 0 and HW * itemsize * min(NC, sublane) > 4 * target_bytes:
        pad_cols = _round_up(HW, 128) - HW
        x2d = jnp.pad(x2d, ((0, 0), (0, pad_cols)))
    HWw = HW + pad_cols
    row_bytes = HWw * itemsize
    total_bytes = NC * row_bytes

    if HWw % 128 == 0 and row_bytes * sublane > target_bytes:
        # Very long rows: tile the lane axis in 128-lane multiples.
        tile_rows = min(NC, sublane)
        tile_cols = (target_bytes // max(tile_rows * itemsize, 1)) // 128 * 128
        tile_cols = min(max(tile_cols, 128), HWw)
    else:
        # Lane-dense full-row blocks; choose how many channel rows per block.
        tile_cols = HWw
        rows_budget = max(1, target_bytes // max(row_bytes, 1))
        if total_bytes > (4 << 20):
            # Never collapse to one block on medium/large tensors: keep at
            # least ~8 row blocks so the pipeline double-buffers and the grid
            # can be split across TensorCores on v7x.
            rows_budget = min(rows_budget,
                              max(sublane, _round_up(pl.cdiv(NC, 8), sublane)))
        if rows_budget >= NC:
            tile_rows = NC            # full extent: always a legal block shape
        else:
            tile_rows = max(sublane, (rows_budget // sublane) * sublane)

    grid = (pl.cdiv(NC, tile_rows), pl.cdiv(HWw, tile_cols))

    out2d = pl.pallas_call(
        _drop_channel_kernel,
        out_shape=jax.ShapeDtypeStruct((NC, HWw), x.dtype),
        grid=grid,
        in_specs=[pl.BlockSpec((tile_rows, 1), lambda i, j: (i, 0)),
                  pl.BlockSpec((tile_rows, tile_cols), lambda i, j: (i, j))],
        out_specs=pl.BlockSpec((tile_rows, tile_cols), lambda i, j: (i, j)),
        compiler_params=pltpu.CompilerParams(
            dimension_semantics=("parallel", "parallel")),
    )(scale, x2d)

    if pad_cols:
        out2d = out2d[:, :HW]
    return out2d.reshape(x.shape)


if __name__ == "__main__":
    key = jax.random.PRNGKey(0)
    x = jax.random.normal(key, (2, 4, 16, 16), dtype=jnp.float32)
    p = 0.2
    keep_prob = 1.0 - p

    # Training mode: per-(N, C) channel dropout with 1/keep_prob rescale.
    y = drop_channel(x, p=p, seed=123, training=True)
    jax.block_until_ready(y)
    assert y.shape == x.shape and y.dtype == x.dtype

    # Every (n, c) channel must be either all zeros (dropped) or exactly
    # x * (1/keep_prob) (kept) -- holds for any realization of the mask.
    x2 = x.reshape(2 * 4, -1)
    y2 = y.reshape(2 * 4, -1)
    scaled = x2 * jnp.float32(1.0 / keep_prob)
    dropped = jnp.all(y2 == 0.0, axis=1)
    kept = jnp.all(jnp.abs(y2 - scaled) <= 1e-5 * jnp.abs(scaled) + 1e-6, axis=1)
    assert bool(jnp.all(dropped | kept))

    # Eval mode (the module's default inference path): identity.
    y_eval = drop_channel(x, p=p, training=False)
    assert bool(jnp.array_equal(y_eval, x))

    print("KERNEL_OK")
</pallas_src>

<mosaic_0001>
module attributes {stable_mosaic.version = 11 : i64} {
  func.func @_drop_channel_kernel(%arg0: i32, %arg1: i32, %arg2: memref<8x1xf32, #tpu.memory_space<vmem>>, %arg3: memref<8x256xf32, #tpu.memory_space<vmem>>, %arg4: memref<8x256xf32, #tpu.memory_space<vmem>>) attributes {dimension_semantics = [#tpu.dimension_semantics<parallel>, #tpu.dimension_semantics<parallel>], iteration_bounds = array<i64: 1, 1>, scalar_prefetch = 0 : i64, scratch_operands = 0 : i64, tpu.core_type = #tpu.core_type<tc>, window_params = [{transform_indices = @transform_0, window_bounds = array<i64: 8, 1>}, {transform_indices = @transform_1, window_bounds = array<i64: 8, 256>}, {transform_indices = @transform_2, window_bounds = array<i64: 8, 256>}]} {
    %c0 = arith.constant 0 : index
    %c0_0 = arith.constant 0 : index
    %0 = vector.load %arg3[%c0, %c0_0] : memref<8x256xf32, #tpu.memory_space<vmem>>, vector<8x256xf32>
    %c0_1 = arith.constant 0 : index
    %c0_2 = arith.constant 0 : index
    %1 = vector.load %arg2[%c0_1, %c0_2] : memref<8x1xf32, #tpu.memory_space<vmem>>, vector<8x1xf32>
    %2 = vector.broadcast %1 : vector<8x1xf32> to vector<8x256xf32>
    %3 = arith.mulf %0, %2 : vector<8x256xf32>
    %c0_3 = arith.constant 0 : index
    %c0_4 = arith.constant 0 : index
    %4 = vector.load %arg4[%c0_3, %c0_4] : memref<8x256xf32, #tpu.memory_space<vmem>>, vector<8x256xf32>
    tpu.vector_store %arg4[%c0_3, %c0_4], %3 {strides = array<i32>} : memref<8x256xf32, #tpu.memory_space<vmem>>, vector<8x256xf32>,
    return
  }
  func.func @transform_0(%arg0: i32, %arg1: i32) -> (i32, i32) {
    %c0_i32 = arith.constant 0 : i32
    %c0_i32_0 = arith.constant 0 : i32
    return %arg0, %c0_i32 : i32, i32
  }
  func.func @transform_1(%arg0: i32, %arg1: i32) -> (i32, i32) {
    %c0_i32 = arith.constant 0 : i32
    return %arg0, %arg1 : i32, i32
  }
  func.func @transform_2(%arg0: i32, %arg1: i32) -> (i32, i32) {
    %c0_i32 = arith.constant 0 : i32
    return %arg0, %arg1 : i32, i32
  }
}

</mosaic_0001>

<llo_original>
// kernel: tpu_custom_call.1
$region0: #{tpu_custom_call.1}
  #allocation0 [shape = 'u32[]', space=smem, size = 0x4, offset = 0x4, fixed_abs, tag = 'smem constant byte address 0x4 - core index']
  #allocation1 [shape = 'u32[144,128]{1,0:T(1,128)}', space=vmem, size = 0x12000, scoped, tag = 'internal scratch']
  %s0 = inlined_call_operand.vmem [shape: f32[8,1], index: 0, kind: input, shape index: {}]
  %s1 = inlined_call_operand.hbm [shape: f32[8,256], index: 1, kind: input, shape index: {}]
  %s2 = inlined_call_operand.hbm [shape: f32[8,256], index: 2, kind: output, shape index: {}]
  %s3 = sld [smem:[#allocation0]]
  $region22: #{tpu_custom_call.1} parent=0
    _
  %s5 = ssub.s32 1, %s3
  %s6 = scalar_select 0, %s5, %s3
  $region1: #{tpu_custom_call.1} parent=0
    #allocation2 [shape = 'u8[8192]{0}', space=vmem, size = 0x2000, scoped, tag = 'input window, operand 1, single buffered']
    #allocation3 [shape = 's32[1]{0}', space=sflag, size = 0x4, scoped, tag = 'scoped memory for tpu_custom_call.1']
    #allocation4 [shape = 's32[1]{0}', space=sflag, size = 0x4, scoped, tag = 'scoped memory for tpu_custom_call.1']
    #allocation5 [shape = 'u8[8192]{0}', space=vmem, size = 0x2000, scoped, tag = 'output window, operand 0, single buffered']
    %7 = vsyncpa [#allocation3], 0
    %8 = vsyncpa [#allocation4], 0
    // Predicated region
    $region2: #{tpu_custom_call.1} parent=1 // pred_check
      _
    $region3: #{tpu_custom_call.1} parent=1 // pred_check_branch
      %10 = sbr.rel (0) target = $region5
    $region4: #{tpu_custom_call.1} parent=1 // pred_region
      _
    $region5: #{tpu_custom_call.1} parent=1 // pred_fallthru
      _
    // Predicated region
    $region6: #{tpu_custom_call.1} parent=1 // pred_check
      _
    $region7: #{tpu_custom_call.1} parent=1 // pred_check_branch
      %12 = sbr.rel (0) target = $region9
    $region8: #{tpu_custom_call.1} parent=1 // pred_region
      %s14 = ssub.s32 256, 256
      %15 = vsyncadd [#allocation3], %s14
      %s17 = sshll.u32 [#allocation2], 4
      %s18 = int_to_ptr.vmem [resolvable:$true] %s17
      %20 = dma.hbm_to_vmem [thread:$0]  %s1, 256, %s18, [#allocation3]
    $region9: #{tpu_custom_call.1} parent=1 // pred_fallthru
      _
    // Predicated region
    $region10: #{tpu_custom_call.1} parent=1 // pred_check
      _
    $region11: #{tpu_custom_call.1} parent=1 // pred_check_branch
      %22 = sbr.rel (0) target = $region13
    $region12: #{tpu_custom_call.1} parent=1 // pred_region
      %23 = dma.done [#allocation3], 256
    $region13: #{tpu_custom_call.1} parent=1 // pred_fallthru
      _
    %v24 = vld [vmem:[#allocation2] sm:$0xff]
    %v25 = vld [vmem:[#allocation2 + $0x8] sm:$0xff]
    %v26 = vld [vmem:[%s0] sm:$0xff]
    %28 = vset.pattern.permute.xlu0 0
    %29 = vperm.xlu0 %28, %v26
    %v30 = vpop.permute.xlu0 %29
    %v32 = vmul.f32 %v24, %v30
    %v33 = vmul.f32 %v25, %v30
    %34 = vst [vmem:[#allocation5] sm:$0xff] %v32
    %35 = vst [vmem:[#allocation5 + $0x8] sm:$0xff] %v33
    // Predicated region
    $region14: #{tpu_custom_call.1} parent=1 // pred_check
      _
    $region15: #{tpu_custom_call.1} parent=1 // pred_check_branch
      %37 = sbr.rel (0) target = $region17
    $region16: #{tpu_custom_call.1} parent=1 // pred_region
      %s39 = ssub.s32 256, 256
      %40 = vsyncadd [#allocation4], %s39
      %s42 = sshll.u32 [#allocation5], 4
      %s43 = int_to_ptr.vmem [resolvable:$true] %s42
      %45 = dma.vmem_to_hbm [thread:$0]  %s43, 256, %s2, [#allocation4]
    $region17: #{tpu_custom_call.1} parent=1 // pred_fallthru
      _
    // Predicated region
    $region18: #{tpu_custom_call.1} parent=1 // pred_check
      _
    $region19: #{tpu_custom_call.1} parent=1 // pred_check_branch
      %47 = sbr.rel (0) target = $region21
    $region20: #{tpu_custom_call.1} parent=1 // pred_region
      %48 = dma.done [#allocation4], 256
    $region21: #{tpu_custom_call.1} parent=1 // pred_fallthru
      _
    %49 = vsyncpa [#allocation3], 1
    %50 = vsyncpa [#allocation4], 1

</llo_original>
